<compile_context>
chip_gen: v7x
topology: tpu7x:2x2x1
jax: 0.10.0
libtpu: 0.0.40
codegen_flags: <defaults>
</compile_context>

<pallas_src>
import functools

import jax
import jax.numpy as jnp
from jax import lax
from jax.experimental import pallas as pl
from jax.experimental.pallas import tpu as pltpu


def _round_up(x, m):
    return ((x + m - 1) // m) * m


def _vmem_cap_bytes():
    """Generation-aware scoped-VMEM ceiling (~75% of physical VMEM)."""
    try:
        cap = int(pltpu.get_tpu_info().vmem_capacity_bytes)
    except Exception:
        cap = 64 << 20                      # conservative (v7x-sized) fallback
    return max(16 << 20, min((cap * 3) // 4, 100 << 20))


def _detect_num_tensorcores():
    """Best-effort TensorCore count (2 on v7x). Falls back to 1."""
    try:
        info = pltpu.get_tpu_info()
        for name in ("num_tensorcores", "tensorcores_per_chip", "num_cores",
                     "core_count"):
            v = getattr(info, name, None)
            if isinstance(v, int) and v > 0:
                return min(v, 2)
    except Exception:
        pass
    try:
        v = getattr(jax.devices()[0], "num_cores", 1)
        return min(int(v), 2) if v else 1
    except Exception:
        return 1


def _choose_tk(c, hw, itemsize, vmem_cap, tk):
    """Reduction-tile size by bytes (~4 MiB / tile), clamped to VMEM and hw."""
    hw128 = _round_up(hw, 128)
    if tk is not None:
        return max(128, min(_round_up(tk, 128), hw128))
    cc_bytes = 6 * c * c * 4                          # acc + resident (c,c) bufs
    min_req = cc_bytes + 2 * 128 * c * itemsize + (2 << 20)
    if min_req > vmem_cap:
        raise ValueError(
            f"StyleLoss kernel: c={c} needs ~{min_req >> 20} MiB VMEM but only "
            f"{vmem_cap >> 20} MiB is available on this generation.")
    per_tile = min(4 << 20, (vmem_cap - cc_bytes - (2 << 20)) // 2)
    tk_eff = max(128, (per_tile // (c * itemsize)) // 128 * 128)
    return min(tk_eff, hw128)


def _vmem_limit(c, tk, itemsize, vmem_cap):
    req = 2 * c * tk * itemsize + 6 * c * c * 4 + (4 << 20)
    return int(min(vmem_cap, max(req, 16 << 20)))


def _prep_features(x):
    """NCHW (b=1) -> (c, hw) features in their HBM dtype (no copy, no cast)."""
    b, c, h, w = x.shape
    assert b == 1, "PyTorch's view(c, h*w) implies batch == 1"
    return x.reshape(c, h * w), c, h * w


def _masked_tile(feat_ref, tile_idx, *, hw, tk, compute_dtype, mask_needed):
    """Load a (c, tk) tile, zero out-of-range columns, cast to compute dtype."""
    f = feat_ref[...]
    if mask_needed:
        col = tile_idx * tk + lax.broadcasted_iota(jnp.int32, (1, tk), 1)
        f = jnp.where(col < hw, f, jnp.zeros_like(f))
    return f.astype(compute_dtype)


def _ffT(f):
    # Contract both operands on their last (lane) dim -> MXU consumes the tile
    # directly (RHS-transposed matmul); no XLU transpose per step.
    return lax.dot_general(f, f,
                           dimension_numbers=(((1,), (1,)), ((), ())),
                           preferred_element_type=jnp.float32)


def _gram_partial_kernel(feat_ref, g_ref, acc_ref, *, hw, tk, nk, nk_s, denom,
                         compute_dtype, mask_needed, guard_needed):
    """Per-split scaled partial gram: g[s] = sum_k F_k F_k^T / denom."""
    s = pl.program_id(0)
    k = pl.program_id(1)
    t = s * nk_s + k                                     # global tile index

    @pl.when(k == 0)
    def _():
        acc_ref[...] = jnp.zeros_like(acc_ref)

    def accum():
        f = _masked_tile(feat_ref, t, hw=hw, tk=tk,
                         compute_dtype=compute_dtype, mask_needed=mask_needed)
        acc_ref[...] += _ffT(f)

    if guard_needed:            # uneven split: skip tiles past the last one
        pl.when(t < nk)(accum)
    else:
        accum()

    @pl.when(k == nk_s - 1)
    def _():
        g_ref[...] = acc_ref[...] * (1.0 / denom)


def _style_loss_kernel(feat_ref, target_ref, loss_ref, acc_ref, *, hw, tk,
                       denom, compute_dtype, mask_needed):
    """Single-split gram + MSE vs target; only the scalar loss leaves VMEM."""
    k = pl.program_id(0)

    @pl.when(k == 0)
    def _():
        acc_ref[...] = jnp.zeros_like(acc_ref)

    f = _masked_tile(feat_ref, k, hw=hw, tk=tk,
                     compute_dtype=compute_dtype, mask_needed=mask_needed)
    acc_ref[...] += _ffT(f)

    @pl.when(k == pl.num_programs(0) - 1)
    def _():
        g = acc_ref[...] * (1.0 / denom)
        diff = g - target_ref[...].astype(jnp.float32)
        loss_ref[...] = jnp.mean(diff * diff, keepdims=True)


def gram_matrix(x, *, tk=None, compute_dtype=jnp.bfloat16, num_splits=None):
    """Pallas equivalent of the PyTorch gram_matrix (b must be 1)."""
    feats, c, hw = _prep_features(x)
    itemsize = feats.dtype.itemsize
    vmem_cap = _vmem_cap_bytes()
    tk_eff = _choose_tk(c, hw, itemsize, vmem_cap, tk)
    nk = pl.cdiv(hw, tk_eff)
    S = num_splits if num_splits is not None else _detect_num_tensorcores()
    S = max(1, min(int(S), nk))
    nk_s = pl.cdiv(nk, S)
    mask_needed = (hw % tk_eff) != 0
    guard_needed = (nk_s * S) != nk

    if guard_needed:   # clamp DMA index in-bounds; kernel guards the compute
        feat_map = lambda s, k: (0, jnp.minimum(s * nk_s + k, nk - 1))
    else:
        feat_map = lambda s, k: (0, s * nk_s + k)

    kernel = functools.partial(
        _gram_partial_kernel, hw=hw, tk=tk_eff, nk=nk, nk_s=nk_s,
        denom=float(c * hw), compute_dtype=compute_dtype,
        mask_needed=mask_needed, guard_needed=guard_needed)

    partials = pl.pallas_call(
        kernel,
        out_shape=jax.ShapeDtypeStruct((S, c, c), jnp.float32),
        grid_spec=pltpu.PrefetchScalarGridSpec(
            num_scalar_prefetch=0,
            grid=(S, nk_s),
            in_specs=[pl.BlockSpec((c, tk_eff), feat_map)],
            out_specs=pl.BlockSpec((None, c, c), lambda s, k: (s, 0, 0)),
            scratch_shapes=[pltpu.VMEM((c, c), jnp.float32)],
        ),
        compiler_params=pltpu.CompilerParams(
            dimension_semantics=("parallel", "arbitrary"),
            vmem_limit_bytes=_vmem_limit(c, tk_eff, itemsize, vmem_cap),
        ),
        cost_estimate=pl.CostEstimate(
            flops=2 * c * c * hw,
            transcendentals=0,
            bytes_accessed=c * hw * itemsize + S * c * c * 4),
    )(feats)
    return partials[0] if S == 1 else partials.sum(axis=0)


def style_loss(x, target_gram, *, tk=None, compute_dtype=jnp.bfloat16,
               num_splits=None):
    """MSE(gram(x), target_gram)."""
    feats, c, hw = _prep_features(x)
    itemsize = feats.dtype.itemsize
    vmem_cap = _vmem_cap_bytes()
    tk_eff = _choose_tk(c, hw, itemsize, vmem_cap, tk)
    nk = pl.cdiv(hw, tk_eff)
    S = num_splits if num_splits is not None else _detect_num_tensorcores()
    S = max(1, min(int(S), nk))

    if S > 1:
        # v7x path: split the hw reduction across TensorCores; the tiny (c,c)
        # combine + MSE runs in plain JAX.
        G = gram_matrix(x, tk=tk, compute_dtype=compute_dtype, num_splits=S)
        diff = G - target_gram.astype(jnp.float32)
        return jnp.mean(diff * diff)

    mask_needed = (hw % tk_eff) != 0
    kernel = functools.partial(
        _style_loss_kernel, hw=hw, tk=tk_eff, denom=float(c * hw),
        compute_dtype=compute_dtype, mask_needed=mask_needed)

    loss = pl.pallas_call(
        kernel,
        out_shape=jax.ShapeDtypeStruct((1, 1), jnp.float32),
        grid_spec=pltpu.PrefetchScalarGridSpec(
            num_scalar_prefetch=0,
            grid=(nk,),
            in_specs=[
                pl.BlockSpec((c, tk_eff), lambda k: (0, k)),   # feature tile
                pl.BlockSpec((c, c), lambda k: (0, 0)),        # resident target
            ],
            out_specs=pl.BlockSpec((1, 1), lambda k: (0, 0)),  # scalar loss
            scratch_shapes=[pltpu.VMEM((c, c), jnp.float32)],
        ),
        compiler_params=pltpu.CompilerParams(
            dimension_semantics=("arbitrary",),
            vmem_limit_bytes=_vmem_limit(c, tk_eff, itemsize, vmem_cap),
        ),
        cost_estimate=pl.CostEstimate(
            flops=2 * c * c * hw,
            transcendentals=0,
            bytes_accessed=c * hw * itemsize + 2 * c * c * 4),
    )(feats, target_gram.astype(jnp.float32))
    return loss[0, 0]


class StyleLoss:
    """JAX/Pallas port of the PyTorch StyleLoss module (forward only)."""

    def __init__(self, target_feature, *, tk=None, compute_dtype=jnp.bfloat16,
                 num_splits=None):
        self._tk = tk
        self._compute_dtype = compute_dtype
        self._num_splits = num_splits
        self.target = gram_matrix(target_feature, tk=tk,
                                  compute_dtype=compute_dtype,
                                  num_splits=num_splits)
        self.loss = jnp.float32(0.0)

    def __call__(self, x):
        self.loss = style_loss(x, self.target, tk=self._tk,
                               compute_dtype=self._compute_dtype,
                               num_splits=self._num_splits)
        return x                          # forward returns the input unchanged


if __name__ == "__main__":
    key = jax.random.PRNGKey(0)
    k1, k2, k3, k4 = jax.random.split(key, 4)

    # Pure-JAX reference with the same bf16 feed / f32 accumulation as the kernel.
    def ref_gram(t):
        _, c, h, w = t.shape
        f = t.reshape(c, h * w).astype(jnp.bfloat16)
        return jnp.dot(f, f.T, preferred_element_type=jnp.float32) / (c * h * w)

    # Case 1: b=1, c=8, 16x16 spatial (hw = 256, lane-aligned).
    target_feature = jax.random.normal(k1, (1, 8, 16, 16), dtype=jnp.float32)
    x = jax.random.normal(k2, (1, 8, 16, 16), dtype=jnp.float32)
    module = StyleLoss(target_feature)
    out = jax.block_until_ready(module(x))
    loss = jax.block_until_ready(module.loss)
    ref_target = ref_gram(target_feature)
    ref_loss = jnp.mean((ref_gram(x) - ref_target) ** 2)
    assert out.shape == x.shape and jnp.allclose(out, x)
    assert jnp.allclose(module.target, ref_target, rtol=1e-4, atol=1e-5), "target gram mismatch"
    assert jnp.allclose(loss, ref_loss, rtol=1e-3, atol=1e-6), (loss, ref_loss)

    # Case 2: ragged hw (14x14 = 196): in-kernel column mask must be exact.
    tf2 = jax.random.normal(k3, (1, 8, 14, 14), dtype=jnp.float32)
    x2 = jax.random.normal(k4, (1, 8, 14, 14), dtype=jnp.float32)
    m2 = StyleLoss(tf2)
    _ = jax.block_until_ready(m2(x2))
    loss2 = jax.block_until_ready(m2.loss)
    ref_loss2 = jnp.mean((ref_gram(x2) - ref_gram(tf2)) ** 2)
    assert jnp.allclose(loss2, ref_loss2, rtol=1e-3, atol=1e-6), (loss2, ref_loss2)

    # Case 3: forced 2-way reduction split (v7x-style path) with an uneven tile
    # count (hw=300, tk=128 -> nk=3 over 2 splits: exercises clamp + guard) and
    # a ragged last tile.
    tf3 = jax.random.normal(k3, (1, 8, 15, 20), dtype=jnp.float32)
    x3 = jax.random.normal(k4, (1, 8, 15, 20), dtype=jnp.float32)
    g_split = jax.block_until_ready(gram_matrix(x3, tk=128, num_splits=2))
    assert jnp.allclose(g_split, ref_gram(x3), rtol=1e-4, atol=1e-5), "split gram mismatch"
    t3 = gram_matrix(tf3, tk=128, num_splits=2)
    loss3 = jax.block_until_ready(style_loss(x3, t3, tk=128, num_splits=2))
    ref_loss3 = jnp.mean((ref_gram(x3) - ref_gram(tf3)) ** 2)
    assert jnp.allclose(loss3, ref_loss3, rtol=1e-3, atol=1e-6), (loss3, ref_loss3)

    print("KERNEL_OK")
</pallas_src>

<mosaic_0001>
module attributes {stable_mosaic.version = 11 : i64} {
  func.func @_gram_partial_kernel(%arg0: i32, %arg1: i32, %arg2: memref<8x256xf32, #tpu.memory_space<vmem>>, %arg3: memref<1x8x8xf32, #tpu.memory_space<vmem>>, %arg4: memref<8x8xf32, #tpu.memory_space<vmem>>) attributes {dimension_semantics = [#tpu.dimension_semantics<parallel>, #tpu.dimension_semantics<arbitrary>], iteration_bounds = array<i64: 1, 1>, scalar_prefetch = 0 : i64, scratch_operands = 1 : i64, tpu.core_type = #tpu.core_type<tc>, window_params = [{transform_indices = @transform_0, window_bounds = array<i64: 8, 256>}, {transform_indices = @transform_1, window_bounds = array<i64: 1, 8, 8>}]} {
    %c0_i32 = arith.constant 0 : i32
    %0 = arith.cmpi eq, %arg1, %c0_i32 : i32
    %1 = arith.extui %0 : i1 to i32
    %c0_i32_0 = arith.constant 0 : i32
    %2 = arith.cmpi ne, %1, %c0_i32_0 : i32
    scf.if %2 {
      %cst_8 = arith.constant 0.000000e+00 : f32
      %12 = vector.broadcast %cst_8 : f32 to vector<8x8xf32>
      %c0_9 = arith.constant 0 : index
      %c0_10 = arith.constant 0 : index
      %13 = vector.load %arg4[%c0_9, %c0_10] : memref<8x8xf32, #tpu.memory_space<vmem>>, vector<8x8xf32>
      tpu.vector_store %arg4[%c0_9, %c0_10], %12 {strides = array<i32>} : memref<8x8xf32, #tpu.memory_space<vmem>>, vector<8x8xf32>,
    } else {
    }
    %c0 = arith.constant 0 : index
    %c0_1 = arith.constant 0 : index
    %3 = vector.load %arg2[%c0, %c0_1] : memref<8x256xf32, #tpu.memory_space<vmem>>, vector<8x256xf32>
    %4 = arith.truncf %3 : vector<8x256xf32> to vector<8x256xbf16>
    %c0_2 = arith.constant 0 : index
    %c0_3 = arith.constant 0 : index
    %5 = vector.load %arg4[%c0_2, %c0_3] : memref<8x8xf32, #tpu.memory_space<vmem>>, vector<8x8xf32>
    %cst = arith.constant dense<0.000000e+00> : vector<8x8xf32>
    %6 = tpu.matmul %4, %4, %cst {dimension_numbers = #tpu.dot_dimension_numbers<[1], [1], [0], [0], [0, 0, 1, 0], [], []>} : vector<8x256xbf16>, vector<8x256xbf16>, vector<8x8xf32> -> vector<8x8xf32>
    %7 = arith.addf %5, %6 : vector<8x8xf32>
    %c0_4 = arith.constant 0 : index
    %c0_5 = arith.constant 0 : index
    %8 = vector.load %arg4[%c0_4, %c0_5] : memref<8x8xf32, #tpu.memory_space<vmem>>, vector<8x8xf32>
    tpu.vector_store %arg4[%c0_4, %c0_5], %7 {strides = array<i32>} : memref<8x8xf32, #tpu.memory_space<vmem>>, vector<8x8xf32>,
    %c0_i32_6 = arith.constant 0 : i32
    %9 = arith.cmpi eq, %arg1, %c0_i32_6 : i32
    %10 = arith.extui %9 : i1 to i32
    %c0_i32_7 = arith.constant 0 : i32
    %11 = arith.cmpi ne, %10, %c0_i32_7 : i32
    scf.if %11 {
      %c0_8 = arith.constant 0 : index
      %c0_9 = arith.constant 0 : index
      %12 = vector.load %arg4[%c0_8, %c0_9] : memref<8x8xf32, #tpu.memory_space<vmem>>, vector<8x8xf32>
      %cst_10 = arith.constant 4.8828125E-4 : f32
      %13 = vector.broadcast %cst_10 : f32 to vector<8x8xf32>
      %14 = arith.mulf %12, %13 : vector<8x8xf32>
      %c0_11 = arith.constant 0 : index
      %c0_12 = arith.constant 0 : index
      %c0_13 = arith.constant 0 : index
      %15 = vector.load %arg3[%c0_11, %c0_12, %c0_13] : memref<1x8x8xf32, #tpu.memory_space<vmem>>, vector<1x8x8xf32>
      %16 = vector.shape_cast %15 : vector<1x8x8xf32> to vector<8x8xf32>
      %17 = vector.shape_cast %14 : vector<8x8xf32> to vector<1x8x8xf32>
      tpu.vector_store %arg3[%c0_11, %c0_12, %c0_13], %17 {strides = array<i32>} : memref<1x8x8xf32, #tpu.memory_space<vmem>>, vector<1x8x8xf32>,
    } else {
    }
    return
  }
  func.func @transform_0(%arg0: i32, %arg1: i32) -> (i32, i32) {
    %c1_i32 = arith.constant 1 : i32
    %0 = arith.muli %arg0, %c1_i32 : i32
    %1 = arith.addi %0, %arg1 : i32
    %c0_i32 = arith.constant 0 : i32
    %c0_i32_0 = arith.constant 0 : i32
    return %c0_i32, %1 : i32, i32
  }
  func.func @transform_1(%arg0: i32, %arg1: i32) -> (i32, i32, i32) {
    %c0_i32 = arith.constant 0 : i32
    %c0_i32_0 = arith.constant 0 : i32
    %c0_i32_1 = arith.constant 0 : i32
    return %arg0, %c0_i32, %c0_i32_0 : i32, i32, i32
  }
}

</mosaic_0001>

<llo_original>
// kernel: tpu_custom_call.1
$region0: #{tpu_custom_call.1}
  #allocation0 [shape = 'u32[]', space=smem, size = 0x4, offset = 0x4, fixed_abs, tag = 'smem constant byte address 0x4 - core index']
  #allocation1 [shape = 'u32[144,128]{1,0:T(1,128)}', space=vmem, size = 0x12000, scoped, tag = 'internal scratch']
  #allocation2 [shape = 'f32[8,8]{1,0:T(8,128)}', space=vmem, size = 0x1000, scoped, tag = 'scratch operand']
  %s0 = inlined_call_operand.hbm [shape: f32[8,256], index: 0, kind: input, shape index: {}]
  %s1 = inlined_call_operand.hbm [shape: f32[1,8,8], index: 1, kind: output, shape index: {}]
  %s2 = sld [smem:[#allocation0]]
  $region26: #{tpu_custom_call.1} parent=0
    _
  %s4 = ssub.s32 1, %s2
  %s5 = scalar_select 0, %s4, %s2
  $region1: #{tpu_custom_call.1} parent=0
    #allocation3 [shape = 'u8[8192]{0}', space=vmem, size = 0x2000, scoped, tag = 'input window, operand 0, single buffered']
    #allocation4 [shape = 's32[1]{0}', space=sflag, size = 0x4, scoped, tag = 'scoped memory for tpu_custom_call.1']
    #allocation5 [shape = 's32[1]{0}', space=sflag, size = 0x4, scoped, tag = 'scoped memory for tpu_custom_call.1']
    #allocation6 [shape = 'u8[4096]{0}', space=vmem, size = 0x1000, scoped, tag = 'output window, operand 0, single buffered']
    %6 = vsyncpa [#allocation4], 0
    %7 = vsyncpa [#allocation5], 0
    // Predicated region
    $region2: #{tpu_custom_call.1} parent=1 // pred_check
      _
    $region3: #{tpu_custom_call.1} parent=1 // pred_check_branch
      %9 = sbr.rel (0) target = $region5
    $region4: #{tpu_custom_call.1} parent=1 // pred_region
      %s10 = sadd.s32 0, 0
      %s11 = smul.u32 2, %s10
      %s13 = ssub.s32 256, 256
      %14 = vsyncadd [#allocation4], %s13
      %s15 = smul.addr %s11, 128
      %s16 = scalar_lea.hbm %s0, %s15
      %s18 = sshll.u32 [#allocation3], 4
      %s19 = int_to_ptr.vmem [resolvable:$true] %s18
      %21 = dma.hbm_to_vmem [thread:$0]  %s16, 256, %s19, [#allocation4]
    $region5: #{tpu_custom_call.1} parent=1 // pred_fallthru
      _
    // Predicated region
    $region6: #{tpu_custom_call.1} parent=1 // pred_check
      _
    $region7: #{tpu_custom_call.1} parent=1 // pred_check_branch
      %23 = sbr.rel (0) target = $region9
    $region8: #{tpu_custom_call.1} parent=1 // pred_region
      %24 = dma.done [#allocation4], 256
    $region9: #{tpu_custom_call.1} parent=1 // pred_fallthru
      _
    %s25 = sadd.s32 0, 0
    %s26 = smul.u32 2, %s25
    %p28 = scmp.eq.s32.totalorder 0, 0
    // Predicated region
    $region10: #{tpu_custom_call.1} parent=1 // pred_check
      %p29 = pneg %p28
    $region11: #{tpu_custom_call.1} parent=1 // pred_check_branch
      %31 = sbr.rel (%p29) target = $region13
    $region12: #{tpu_custom_call.1} parent=1 // pred_region
      %vm32 = vcmask 64512
      %33 = vst.msk [vmem:[#allocation2] sm:$0xff] %vm32, 0.0
    $region13: #{tpu_custom_call.1} parent=1 // pred_fallthru
      _
    %v34 = vld [vmem:[#allocation3] sm:$0xff]
    %v35 = vld [vmem:[#allocation3 + $0x8] sm:$0xff]
    %v36 = vpack.c.bf16 %v34, %v34
    %v37 = vpack.c.bf16 %v35, %v35
    %v38 = vld [vmem:[#allocation2] sm:$0xff]
    %39 = vmatprep.subr.bf16.mxu0 %v37
    %40 = vmatpush1.bf16.xpose.msra.mxu0 %v36
    %41 = vmatprep.subr.bf16.mxu0 0
    %42 = vmatpush1.bf16.xpose.msra.mxu0 0
    %43 = vmatprep.subr.bf16.mxu0 0
    %44 = vmatpush1.bf16.xpose.msra.mxu0 0
    %45 = vmatprep.subr.bf16.mxu0 0
    %46 = vmatpush1.bf16.xpose.msra.mxu0 0
    %47 = vmatprep.subr.bf16.mxu0 0
    %48 = vmatpush1.bf16.xpose.msra.mxu0 0
    %49 = vmatprep.subr.bf16.mxu0 0
    %50 = vmatpush1.bf16.xpose.msra.mxu0 0
    %51 = vmatprep.subr.bf16.mxu0 0
    %52 = vmatpush1.bf16.xpose.msra.mxu0 0
    %53 = vmatprep.subr.bf16.mxu0 0
    %54 = vmatpush1.bf16.xpose.msra.mxu0 0
    %55 = vmatprep.subr.bf16.mxu0 0
    %56 = vmatpush1.bf16.xpose.msra.mxu0 0
    %57 = vmatprep.subr.bf16.mxu0 0
    %58 = vmatpush1.bf16.xpose.msra.mxu0 0
    %59 = vmatprep.subr.bf16.mxu0 0
    %60 = vmatpush1.bf16.xpose.msra.mxu0 0
    %61 = vmatprep.subr.bf16.mxu0 0
    %62 = vmatpush1.bf16.xpose.msra.mxu0 0
    %63 = vmatprep.subr.bf16.mxu0 0
    %64 = vmatpush1.bf16.xpose.msra.mxu0 0
    %65 = vmatprep.subr.bf16.mxu0 0
    %66 = vmatpush1.bf16.xpose.msra.mxu0 0
    %67 = vmatprep.subr.bf16.mxu0 0
    %68 = vmatpush1.bf16.xpose.msra.mxu0 0
    %69 = vmatprep.subr.bf16.mxu0 0
    %70 = vmatpush1.bf16.xpose.msra.mxu0 0
    %71 = vmatprep.mubr.bf16.mxu0 %v37
    %72 = vmatmul.mubr.bf16.gmra.mrb[0].mxu0 %v36
    %v73 = vpop.f32.mrb[0].mxu0
    %v74 = vadd.f32 0.0, %v73
    %v75 = vpop.f32.mrb[0].mxu0
    %v76 = vpop.f32.mrb[0].mxu0
    %v77 = vpop.f32.mrb[0].mxu0
    %78 = vdwg.mxu0
    %v79 = vadd.f32 %v38, %v74
    %vm80 = vcmask 64512
    %81 = vst.msk [vmem:[#allocation2] sm:$0xff] %vm80, %v79
    // Predicated region
    $region14: #{tpu_custom_call.1} parent=1 // pred_check
      %p82 = pneg %p28
    $region15: #{tpu_custom_call.1} parent=1 // pred_check_branch
      %84 = sbr.rel (%p82) target = $region17
    $region16: #{tpu_custom_call.1} parent=1 // pred_region
      %v85 = vld [vmem:[#allocation2] sm:$0xff]
      %v86 = vmul.f32 %v85, 0.00048828125
      %87 = vst.msk [vmem:[#allocation6] sm:$0xff] %vm80, %v86
    $region17: #{tpu_custom_call.1} parent=1 // pred_fallthru
      _
    // Predicated region
    $region18: #{tpu_custom_call.1} parent=1 // pred_check
      _
    $region19: #{tpu_custom_call.1} parent=1 // pred_check_branch
      %89 = sbr.rel (0) target = $region21
    $region20: #{tpu_custom_call.1} parent=1 // pred_region
      %s91 = ssub.s32 128, 128
      %92 = vsyncadd [#allocation5], %s91
      %s94 = sshll.u32 [#allocation6], 4
      %s95 = int_to_ptr.vmem [resolvable:$true] %s94
      %97 = dma.vmem_to_hbm [thread:$0]  %s95, 128, %s1, [#allocation5]
    $region21: #{tpu_custom_call.1} parent=1 // pred_fallthru
      _
    // Predicated region
    $region22: #{tpu_custom_call.1} parent=1 // pred_check
      _
    $region23: #{tpu_custom_call.1} parent=1 // pred_check_branch
      %99 = sbr.rel (0) target = $region25
    $region24: #{tpu_custom_call.1} parent=1 // pred_region
      %100 = dma.done [#allocation5], 128
    $region25: #{tpu_custom_call.1} parent=1 // pred_fallthru
      _
    %101 = vsyncpa [#allocation4], 1
    %102 = vsyncpa [#allocation5], 1

</llo_original>
